<compile_context>
chip_gen: v7x
topology: tpu7x:2x2x1
jax: 0.10.0
libtpu: 0.0.40
codegen_flags: <defaults>
</compile_context>

<pallas_src>
import functools

import jax
import jax.numpy as jnp
from jax.experimental import pallas as pl
from jax.experimental.pallas import tpu as pltpu


def _round_up(a, b):
    return (a + b - 1) // b * b


def _box_sum_kernel_separable(x_ref, o_ref, *, k, t_h, w_out):
    # x_ref: (nb, t_h + k - 1, w_pad)   o_ref: (nb, t_h, w_out)
    x = x_ref[...].astype(jnp.float32)          # hoisted cast (single VPU cast)
    # Pass 1: horizontal box sum over k lane-shifted slices -> (nb, h_in, w_out)
    row = x[:, :, 0:w_out]
    for kw in range(1, k):
        row = row + x[:, :, kw:kw + w_out]
    # Pass 2: vertical box sum over k sublane-shifted slices -> (nb, t_h, w_out)
    acc = row[:, 0:t_h, :]
    for kh in range(1, k):
        acc = acc + row[:, kh:kh + t_h, :]
    o_ref[...] = acc.astype(o_ref.dtype)


def _box_sum_kernel_mxu(x_ref, o_ref, *, k, t_h, w_out):
    # Box sum as out[b] = A_h @ x[b] @ A_w with banded all-ones matrices
    # (used for large k so the work lands on the MXU instead of VALU/XLU).
    x = x_ref[...].astype(jnp.float32)          # (nb, h_in, w_in)
    nb, h_in, w_in = x.shape
    # A_h[o, i] = 1  iff  o <= i < o + k         shape (t_h, h_in)
    o_idx = jax.lax.broadcasted_iota(jnp.int32, (t_h, h_in), 0)
    i_idx = jax.lax.broadcasted_iota(jnp.int32, (t_h, h_in), 1)
    a_h = ((i_idx >= o_idx) & (i_idx < o_idx + k)).astype(jnp.float32)
    # A_w[i, o] = 1  iff  o <= i < o + k         shape (w_in, w_out)
    i_idx = jax.lax.broadcasted_iota(jnp.int32, (w_in, w_out), 0)
    o_idx = jax.lax.broadcasted_iota(jnp.int32, (w_in, w_out), 1)
    a_w = ((i_idx >= o_idx) & (i_idx < o_idx + k)).astype(jnp.float32)
    for b in range(nb):                         # nb is a small static block dim
        t = jnp.dot(x[b], a_w, preferred_element_type=jnp.float32)       # (h_in, w_out)
        o_ref[b] = jnp.dot(a_h, t, preferred_element_type=jnp.float32).astype(o_ref.dtype)


def conv_forward(x, block_size):
    """x: (N, 1, H, W) float -> (N, 1, H-k+1, W-k+1).

    Matches F.conv2d(x, ones((1,1,k,k))) with stride 1 and no padding.
    Accumulation is in f32 and cast back to x.dtype (exact for f32 inputs).
    """
    n, c, h, w = x.shape
    if c != 1:
        raise ValueError("Conv uses a (1,1,k,k) all-ones weight -> C must be 1")
    k = int(block_size)
    if k < 1 or k > h or k > w:
        raise ValueError(f"block_size={k} must satisfy 1 <= k <= min(H, W)={min(h, w)}")

    h_out = h - k + 1
    w_out = w - k + 1

    # ---- lane-dense / sublane-friendly padded geometry --------------------
    w_out_p = _round_up(w_out, 128)     # output lane width: multiple of 128
    w_pad = w_out_p + k - 1
    h_out_p = _round_up(h_out, 8)

    # ---- VMEM-aware H tiling + batch packing -------------------------------
    budget = 24 * 1024 * 1024           # keep estimate under the requested 32 MiB

    def est_bytes(nb, t_h):
        h_in = t_h + k - 1
        # 2x double-buffered input + f32 intermediate + 2x double-buffered out
        return 4 * nb * (2 * h_in * w_pad + h_in * w_out_p + 2 * t_h * w_out_p)

    t_h = h_out_p
    while est_bytes(1, t_h) > budget and t_h > 8:
        t_h = _round_up(max(8, t_h // 2), 8)
    n_h = -(-h_out // t_h)              # ceil: number of H chunks
    h_out_total = n_h * t_h
    h_pad = h_out_total + k - 1
    chunk_h_in = t_h + k - 1

    b_total = n * n_h
    nb = 1
    for cand in (8, 4, 2):
        if cand <= b_total and est_bytes(cand, t_h) <= budget:
            nb = cand
            break
    b_pad = _round_up(b_total, nb)

    # ---- wrapper-side layout plumbing (plain JAX glue) ---------------------
    x3 = x.reshape(n, h, w)
    x3 = jnp.pad(x3, ((0, 0), (0, h_pad - h), (0, w_pad - w)))
    if n_h > 1:
        # Overlapping H chunks (halo = k - 1 rows) so every grid step is
        # independent and fits the per-generation VMEM budget.
        x3 = jnp.stack(
            [x3[:, ci * t_h: ci * t_h + chunk_h_in, :] for ci in range(n_h)],
            axis=1,
        ).reshape(n * n_h, chunk_h_in, w_pad)
    if b_pad > b_total:
        x3 = jnp.pad(x3, ((0, b_pad - b_total), (0, 0), (0, 0)))

    kern = _box_sum_kernel_mxu if k >= 8 else _box_sum_kernel_separable
    kernel = functools.partial(kern, k=k, t_h=t_h, w_out=w_out_p)

    out = pl.pallas_call(
        kernel,
        out_shape=jax.ShapeDtypeStruct((b_pad, t_h, w_out_p), x.dtype),
        grid_spec=pltpu.PrefetchScalarGridSpec(
            num_scalar_prefetch=0,
            grid=(b_pad // nb,),
            in_specs=[pl.BlockSpec((nb, chunk_h_in, w_pad), lambda i: (i, 0, 0))],
            out_specs=pl.BlockSpec((nb, t_h, w_out_p), lambda i: (i, 0, 0)),
        ),
        compiler_params=pltpu.CompilerParams(
            dimension_semantics=("parallel",),
            vmem_limit_bytes=32 * 1024 * 1024,
        ),
    )(x3)

    # Drop batch padding, stitch H chunks back together, slice valid region.
    out = out[:b_total].reshape(n, h_out_total, w_out_p)[:, :h_out, :w_out]
    return out.reshape(n, 1, h_out, w_out)
    # TODO(synk): for very skinny W with tall H, a wrapper transpose mapping H
    # to the lane axis would avoid computing on padded zero lanes.


def _conv_ref(x, block_size):
    wgt = jnp.ones((1, 1, block_size, block_size), dtype=x.dtype)
    return jax.lax.conv_general_dilated(
        x, wgt, window_strides=(1, 1), padding="VALID",
        dimension_numbers=("NCHW", "OIHW", "NCHW"),
        precision=jax.lax.Precision.HIGHEST,
    )


if __name__ == "__main__":
    key = jax.random.PRNGKey(0)

    # Case 1: small k -> separable VPU/XLU path.
    block_size = 3
    x = jax.random.normal(key, (2, 1, 16, 16), dtype=jnp.float32)
    out = jax.block_until_ready(conv_forward(x, block_size))
    ref = _conv_ref(x, block_size)
    assert out.shape == ref.shape
    assert jnp.allclose(out, ref, atol=1e-4, rtol=1e-4)

    # Case 2: large k -> banded-matrix MXU path.
    block_size2 = 9
    x2 = jax.random.normal(jax.random.PRNGKey(0), (2, 1, 24, 24), dtype=jnp.float32)
    out2 = jax.block_until_ready(conv_forward(x2, block_size2))
    ref2 = _conv_ref(x2, block_size2)
    assert out2.shape == ref2.shape
    assert jnp.allclose(out2, ref2, atol=5e-2, rtol=1e-2)

    print("KERNEL_OK")
</pallas_src>

<mosaic_0001>
module attributes {stable_mosaic.version = 11 : i64} {
  func.func @_box_sum_kernel_separable(%arg0: i32, %arg1: memref<2x18x130xf32, #tpu.memory_space<vmem>>, %arg2: memref<2x16x128xf32, #tpu.memory_space<vmem>>) attributes {dimension_semantics = [#tpu.dimension_semantics<parallel>], iteration_bounds = array<i64: 1>, scalar_prefetch = 0 : i64, scratch_operands = 0 : i64, tpu.core_type = #tpu.core_type<tc>, window_params = [{transform_indices = @transform_0, window_bounds = array<i64: 2, 18, 130>}, {transform_indices = @transform_1, window_bounds = array<i64: 2, 16, 128>}]} {
    %c0 = arith.constant 0 : index
    %c0_0 = arith.constant 0 : index
    %c0_1 = arith.constant 0 : index
    %0 = vector.load %arg1[%c0, %c0_0, %c0_1] : memref<2x18x130xf32, #tpu.memory_space<vmem>>, vector<2x18x130xf32>
    %1 = vector.extract_strided_slice %0 {offsets = [0, 0, 0], sizes = [2, 18, 128], strides = [1, 1, 1]} : vector<2x18x130xf32> to vector<2x18x128xf32>
    %2 = vector.extract_strided_slice %0 {offsets = [0, 0, 1], sizes = [2, 18, 128], strides = [1, 1, 1]} : vector<2x18x130xf32> to vector<2x18x128xf32>
    %3 = arith.addf %1, %2 : vector<2x18x128xf32>
    %4 = vector.extract_strided_slice %0 {offsets = [0, 0, 2], sizes = [2, 18, 128], strides = [1, 1, 1]} : vector<2x18x130xf32> to vector<2x18x128xf32>
    %5 = arith.addf %3, %4 : vector<2x18x128xf32>
    %6 = vector.extract_strided_slice %5 {offsets = [0, 0, 0], sizes = [2, 16, 128], strides = [1, 1, 1]} : vector<2x18x128xf32> to vector<2x16x128xf32>
    %7 = vector.extract_strided_slice %5 {offsets = [0, 1, 0], sizes = [2, 16, 128], strides = [1, 1, 1]} : vector<2x18x128xf32> to vector<2x16x128xf32>
    %8 = arith.addf %6, %7 : vector<2x16x128xf32>
    %9 = vector.extract_strided_slice %5 {offsets = [0, 2, 0], sizes = [2, 16, 128], strides = [1, 1, 1]} : vector<2x18x128xf32> to vector<2x16x128xf32>
    %10 = arith.addf %8, %9 : vector<2x16x128xf32>
    %c0_2 = arith.constant 0 : index
    %c0_3 = arith.constant 0 : index
    %c0_4 = arith.constant 0 : index
    %11 = vector.load %arg2[%c0_2, %c0_3, %c0_4] : memref<2x16x128xf32, #tpu.memory_space<vmem>>, vector<2x16x128xf32>
    tpu.vector_store %arg2[%c0_2, %c0_3, %c0_4], %10 {strides = array<i32>} : memref<2x16x128xf32, #tpu.memory_space<vmem>>, vector<2x16x128xf32>,
    return
  }
  func.func @transform_0(%arg0: i32) -> (i32, i32, i32) {
    %c0_i32 = arith.constant 0 : i32
    %c0_i32_0 = arith.constant 0 : i32
    %c0_i32_1 = arith.constant 0 : i32
    return %arg0, %c0_i32, %c0_i32_0 : i32, i32, i32
  }
  func.func @transform_1(%arg0: i32) -> (i32, i32, i32) {
    %c0_i32 = arith.constant 0 : i32
    %c0_i32_0 = arith.constant 0 : i32
    %c0_i32_1 = arith.constant 0 : i32
    return %arg0, %c0_i32, %c0_i32_0 : i32, i32, i32
  }
}

</mosaic_0001>

<llo_original>
// kernel: tpu_custom_call.1
$region0: #{tpu_custom_call.1}
  #allocation0 [shape = 'u32[]', space=smem, size = 0x4, offset = 0x4, fixed_abs, tag = 'smem constant byte address 0x4 - core index']
  #allocation1 [shape = 'u32[144,128]{1,0:T(1,128)}', space=vmem, size = 0x12000, scoped, tag = 'internal scratch']
  %s0 = inlined_call_operand.vmem [shape: f32[2,18,130], index: 0, kind: input, shape index: {}]
  %s1 = inlined_call_operand.hbm [shape: f32[2,16,128], index: 1, kind: output, shape index: {}]
  %s2 = sld [smem:[#allocation0]]
  $region14: #{tpu_custom_call.1} parent=0
    _
  %s4 = ssub.s32 1, %s2
  %s5 = scalar_select 0, %s4, %s2
  $region1: #{tpu_custom_call.1} parent=0
    #allocation2 [shape = 'u8[16384]{0}', space=vmem, size = 0x4000, scoped, tag = 'output window, operand 0, single buffered']
    #allocation3 [shape = 's32[1]{0}', space=sflag, size = 0x4, scoped, tag = 'scoped memory for tpu_custom_call.1']
    %6 = vsyncpa [#allocation3], 0
    // Predicated region
    $region2: #{tpu_custom_call.1} parent=1 // pred_check
      _
    $region3: #{tpu_custom_call.1} parent=1 // pred_check_branch
      %8 = sbr.rel (0) target = $region5
    $region4: #{tpu_custom_call.1} parent=1 // pred_region
      _
    $region5: #{tpu_custom_call.1} parent=1 // pred_fallthru
      _
    %v9 = vld [vmem:[%s0] sm:$0xff]
    %v10 = vld [vmem:[%s0 + $0x8] sm:$0xff]
    %v11 = vld [vmem:[%s0 + $0x10] sm:$0xff]
    %v12 = vld [vmem:[%s0 + $0x18] sm:$0xff]
    %v13 = vld [vmem:[%s0 + $0x20] sm:$0x3]
    %v14 = vld [vmem:[%s0 + $0x28] sm:$0x3]
    %v15 = vld [vmem:[%s0 + $0x30] sm:$0xff]
    %v16 = vld [vmem:[%s0 + $0x38] sm:$0xff]
    %v17 = vld [vmem:[%s0 + $0x40] sm:$0xff]
    %v18 = vld [vmem:[%s0 + $0x48] sm:$0xff]
    %v19 = vld [vmem:[%s0 + $0x50] sm:$0x3]
    %v20 = vld [vmem:[%s0 + $0x58] sm:$0x3]
    %33 = vrot.lane.b32.xlu0 %v9, 127
    %v34 = vpop.permute.xlu0 %33
    %35 = vrot.lane.b32.xlu0 %v10, 127
    %v36 = vpop.permute.xlu0 %35
    %37 = vrot.lane.b32.xlu0 %v11, 127
    %v38 = vpop.permute.xlu0 %37
    %39 = vrot.lane.b32.xlu0 %v12, 127
    %v40 = vpop.permute.xlu0 %39
    %41 = vrot.lane.b32.xlu0 %v13, 127
    %v42 = vpop.permute.xlu0 %41
    %43 = vrot.lane.b32.xlu0 %v14, 127
    %v44 = vpop.permute.xlu0 %43
    %45 = vrot.lane.b32.xlu0 %v15, 127
    %v46 = vpop.permute.xlu0 %45
    %47 = vrot.lane.b32.xlu0 %v16, 127
    %v48 = vpop.permute.xlu0 %47
    %49 = vrot.lane.b32.xlu0 %v17, 127
    %v50 = vpop.permute.xlu0 %49
    %51 = vrot.lane.b32.xlu0 %v18, 127
    %v52 = vpop.permute.xlu0 %51
    %53 = vrot.lane.b32.xlu0 %v19, 127
    %v54 = vpop.permute.xlu0 %53
    %55 = vrot.lane.b32.xlu0 %v20, 127
    %v56 = vpop.permute.xlu0 %55
    %vm57 = vcmask 1039360
    %v58 = vsel %vm57, %v34, %v36
    %v59 = vsel %vm57, %v38, %v40
    %v60 = vsel %vm57, %v42, %v44
    %v61 = vsel %vm57, %v46, %v48
    %v62 = vsel %vm57, %v50, %v52
    %v63 = vsel %vm57, %v54, %v56
    %v70 = vadd.f32 %v9, %v58
    %v71 = vadd.f32 %v11, %v59
    %v72 = vadd.f32 %v13, %v60
    %v73 = vadd.f32 %v15, %v61
    %v74 = vadd.f32 %v17, %v62
    %v75 = vadd.f32 %v19, %v63
    %76 = vrot.lane.b32.xlu0 %v9, 126
    %v77 = vpop.permute.xlu0 %76
    %78 = vrot.lane.b32.xlu0 %v10, 126
    %v79 = vpop.permute.xlu0 %78
    %80 = vrot.lane.b32.xlu0 %v11, 126
    %v81 = vpop.permute.xlu0 %80
    %82 = vrot.lane.b32.xlu0 %v12, 126
    %v83 = vpop.permute.xlu0 %82
    %84 = vrot.lane.b32.xlu0 %v13, 126
    %v85 = vpop.permute.xlu0 %84
    %86 = vrot.lane.b32.xlu0 %v14, 126
    %v87 = vpop.permute.xlu0 %86
    %88 = vrot.lane.b32.xlu0 %v15, 126
    %v89 = vpop.permute.xlu0 %88
    %90 = vrot.lane.b32.xlu0 %v16, 126
    %v91 = vpop.permute.xlu0 %90
    %92 = vrot.lane.b32.xlu0 %v17, 126
    %v93 = vpop.permute.xlu0 %92
    %94 = vrot.lane.b32.xlu0 %v18, 126
    %v95 = vpop.permute.xlu0 %94
    %96 = vrot.lane.b32.xlu0 %v19, 126
    %v97 = vpop.permute.xlu0 %96
    %98 = vrot.lane.b32.xlu0 %v20, 126
    %v99 = vpop.permute.xlu0 %98
    %vm100 = vcmask 1031168
    %v101 = vsel %vm100, %v77, %v79
    %v102 = vsel %vm100, %v81, %v83
    %v103 = vsel %vm100, %v85, %v87
    %v104 = vsel %vm100, %v89, %v91
    %v105 = vsel %vm100, %v93, %v95
    %v106 = vsel %vm100, %v97, %v99
    %v113 = vadd.f32 %v70, %v101
    %v114 = vadd.f32 %v71, %v102
    %v115 = vadd.f32 %v72, %v103
    %v116 = vadd.f32 %v73, %v104
    %v117 = vadd.f32 %v74, %v105
    %v118 = vadd.f32 %v75, %v106
    %vm125 = vcmask 1046528
    %v126 = vrot.slane %v113, 1
    %v127 = vrot.slane %v114, 1
    %v128 = vsel %vm125, %v126, %v127
    %v129 = vrot.slane %v115, 1
    %v130 = vsel %vm125, %v127, %v129
    %v131 = vrot.slane %v116, 1
    %v132 = vrot.slane %v117, 1
    %v133 = vsel %vm125, %v131, %v132
    %v134 = vrot.slane %v118, 1
    %v135 = vsel %vm125, %v132, %v134
    %v140 = vadd.f32 %v113, %v128
    %v141 = vadd.f32 %v114, %v130
    %v142 = vadd.f32 %v116, %v133
    %v143 = vadd.f32 %v117, %v135
    %vm144 = vcmask 1045504
    %v145 = vrot.slane %v113, 2
    %v146 = vrot.slane %v114, 2
    %v147 = vsel %vm144, %v145, %v146
    %v148 = vrot.slane %v115, 2
    %v149 = vsel %vm144, %v146, %v148
    %v150 = vrot.slane %v116, 2
    %v151 = vrot.slane %v117, 2
    %v152 = vsel %vm144, %v150, %v151
    %v153 = vrot.slane %v118, 2
    %v154 = vsel %vm144, %v151, %v153
    %v159 = vadd.f32 %v140, %v147
    %v160 = vadd.f32 %v141, %v149
    %v161 = vadd.f32 %v142, %v152
    %v162 = vadd.f32 %v143, %v154
    %163 = vst [vmem:[#allocation2] sm:$0xff] %v159
    %164 = vst [vmem:[#allocation2 + $0x8] sm:$0xff] %v160
    %165 = vst [vmem:[#allocation2 + $0x10] sm:$0xff] %v161
    %166 = vst [vmem:[#allocation2 + $0x18] sm:$0xff] %v162
    // Predicated region
    $region6: #{tpu_custom_call.1} parent=1 // pred_check
      _
    $region7: #{tpu_custom_call.1} parent=1 // pred_check_branch
      %168 = sbr.rel (0) target = $region9
    $region8: #{tpu_custom_call.1} parent=1 // pred_region
      %s170 = ssub.s32 512, 512
      %171 = vsyncadd [#allocation3], %s170
      %s172 = sshll.u32 [#allocation2], 4
      %s173 = int_to_ptr.vmem [resolvable:$true] %s172
      %178 = dma.vmem_to_hbm [thread:$0]  %s173, 512, %s1, [#allocation3], 128, 128, 8
    $region9: #{tpu_custom_call.1} parent=1 // pred_fallthru
      _
    // Predicated region
    $region10: #{tpu_custom_call.1} parent=1 // pred_check
      _
    $region11: #{tpu_custom_call.1} parent=1 // pred_check_branch
      %180 = sbr.rel (0) target = $region13
    $region12: #{tpu_custom_call.1} parent=1 // pred_region
      %181 = dma.done [#allocation3], 512
    $region13: #{tpu_custom_call.1} parent=1 // pred_fallthru
      _
    %182 = vsyncpa [#allocation3], 1

</llo_original>
